<compile_context>
chip_gen: v5e
topology: v5e:2x2
jax: 0.10.0
libtpu: 0.0.40
codegen_flags: <defaults>
</compile_context>

<pallas_src>
import functools

import jax
import jax.numpy as jnp
from jax.experimental import pallas as pl
from jax.experimental.pallas import tpu as pltpu

LANE = 128


def _round_up(x, m):
    return (x + m - 1) // m * m


def _vmem_budget_bytes(headroom_bytes=12 << 20):
    """Generation-aware usable VMEM (per TensorCore) with headroom."""
    try:
        cap = int(pltpu.get_tpu_info().vmem_capacity_bytes)
    except Exception:
        cap = 64 << 20  # conservative default: v7x per-TC VMEM
    cap = min(cap, 128 << 20)
    return max(cap - headroom_bytes, 16 << 20)


# ---------------------------------------------------------------------------
# One-time parameter preparation (pad/cast hoisted out of the forward pass).
# ---------------------------------------------------------------------------
def prepare_mlp_params(params, compute_dtype=jnp.float32):
    """Pad every feature dim to a multiple of 128 and cast once.

    params: list of (W, b) with W shaped (in_features, out_features).
    Returns a list of (W_padded[compute_dtype], b_padded[f32, (1, out_p)],
    (in_features, out_features)).
    """
    prepared = []
    for w, b in params:
        kin, kout = w.shape
        kin_p, kout_p = _round_up(kin, LANE), _round_up(kout, LANE)
        w_p = jnp.pad(w.astype(compute_dtype),
                      ((0, kin_p - kin), (0, kout_p - kout)))
        b_p = jnp.pad(b.astype(jnp.float32),
                      (0, kout_p - kout)).reshape(1, kout_p)
        prepared.append((w_p, b_p, (kin, kout)))
    return prepared


# ---------------------------------------------------------------------------
# Fused MLP kernel: one grid axis over batch row-tiles, all weights resident.
# ---------------------------------------------------------------------------
def _fused_mlp_kernel(*refs, num_layers):
    x_ref, o_ref = refs[0], refs[-1]
    wb = refs[1:-1]

    h = x_ref[...]                                  # (tm, K0_p), compute dtype
    for i in range(num_layers):
        w = wb[2 * i][...]                          # (K_i, N_i), compute dtype
        b = wb[2 * i + 1][...]                      # (1,  N_i), float32
        # MXU matmul with f32 accumulation; bias/ReLU epilogue in f32.
        y = jnp.dot(h, w, preferred_element_type=jnp.float32) + b
        if i < num_layers - 1:
            # Drop back to the compute dtype so the live intermediate (and the
            # next matmul's vld traffic) is halved on the bf16 path.
            h = jnp.maximum(y, 0.0).astype(w.dtype)
        else:
            h = y
    o_ref[...] = h.astype(o_ref.dtype)


def mlp_forward(params, x, *, compute_dtype=None, tm=None):
    """Fused MLP forward as a single pallas_call.

    `params` is either raw [(W, b), ...] (W shaped (in, out)) or, preferably,
    the output of prepare_mlp_params (so padding/casting happens once).
    """
    if compute_dtype is None:
        compute_dtype = x.dtype
    prepared = (params if len(params[0]) == 3
                else prepare_mlp_params(params, compute_dtype=compute_dtype))
    compute_dtype = jnp.dtype(prepared[0][0].dtype)

    M, K0 = x.shape
    num_layers = len(prepared)
    k0_p = prepared[0][0].shape[0]
    n_out = prepared[-1][2][1]
    n_out_p = prepared[-1][0].shape[1]
    out_dtype = x.dtype
    assert prepared[0][2][0] == K0, "x feature dim does not match layer 0"

    cdt = compute_dtype.itemsize
    odt = jnp.dtype(out_dtype).itemsize
    max_w_p = max(p[0].shape[1] for p in prepared)

    # Row-tile heuristic: large MXU-friendly tiles, but keep >= 2 grid steps
    # whenever possible so v7x's two TensorCores both get work.
    if tm is None:
        tm = 512 if M >= 2048 else (256 if M >= 512 else 128)
    tm = max(128, min(tm, _round_up(M, LANE)))
    while tm >= 256 and pl.cdiv(M, tm) < 2:
        tm //= 2

    budget = _vmem_budget_bytes()

    def _footprint(tile_m, weight_buffers):
        resident = sum(weight_buffers * (w.size * cdt + b.size * 4)
                       for w, b, _ in prepared)
        per_step = (2 * tile_m * k0_p * cdt          # x, double-buffered
                    + 2 * tile_m * n_out_p * odt     # out, double-buffered
                    + 2 * tile_m * max_w_p * 4)      # live f32 epilogue temps
        return resident + per_step + (2 << 20)

    # Shrink tm if that is what it takes to stay resident.
    while tm >= 256 and _footprint(tm, 1) > budget:
        tm //= 2

    if _footprint(tm, 1) > budget:
        # Resident weights exceed per-TC VMEM (e.g. very wide layers on v7x's
        # 64 MiB/TC): stream each layer through the K/N-tiled fallback.
        h = x.astype(compute_dtype)
        if k0_p != K0:
            h = jnp.pad(h, ((0, 0), (0, k0_p - K0)))
        for i, (w_p, b_p, _) in enumerate(prepared):
            last = i == num_layers - 1
            h = linear_pallas_tiled(
                h, w_p, b_p[0], apply_relu=not last,
                compute_dtype=compute_dtype,
                out_dtype=out_dtype if last else compute_dtype)
        return h[:, :n_out]

    # Per-call prep on x: pad only the feature dim (no M-padded copy).
    x_p = x.astype(compute_dtype)
    if k0_p != K0:
        x_p = jnp.pad(x_p, ((0, 0), (0, k0_p - K0)))

    grid_m = pl.cdiv(M, tm)
    flops = int(sum(2 * M * w.shape[0] * w.shape[1] for w, _, _ in prepared))
    bytes_accessed = int(x_p.size * cdt + M * n_out_p * odt
                         + sum(w.size * cdt + b.size * 4
                               for w, b, _ in prepared))
    # Valid even if the single-buffer request below falls back to 2 buffers.
    vmem_limit = int(min(budget, max(_footprint(tm, 2) + (8 << 20), 32 << 20)))

    kernel = functools.partial(_fused_mlp_kernel, num_layers=num_layers)

    def _call(single_buffer_weights):
        in_specs = [pl.BlockSpec((tm, k0_p), lambda i: (i, 0))]
        operands = [x_p]
        for w_p, b_p, _ in prepared:
            kin_p, kout_p = w_p.shape
            extra = (dict(pipeline_mode=pl.Buffered(1))
                     if single_buffer_weights else {})
            in_specs.append(
                pl.BlockSpec((kin_p, kout_p), lambda i: (0, 0), **extra))
            in_specs.append(
                pl.BlockSpec((1, kout_p), lambda i: (0, 0), **extra))
            operands += [w_p, b_p]
        return pl.pallas_call(
            kernel,
            out_shape=jax.ShapeDtypeStruct((M, n_out_p), out_dtype),
            grid_spec=pltpu.PrefetchScalarGridSpec(
                num_scalar_prefetch=0,
                grid=(grid_m,),
                in_specs=in_specs,
                out_specs=pl.BlockSpec((tm, n_out_p), lambda i: (i, 0)),
            ),
            compiler_params=pltpu.CompilerParams(
                dimension_semantics=("parallel",),   # shards across v7x's 2 TCs
                vmem_limit_bytes=vmem_limit),
            cost_estimate=pl.CostEstimate(flops=flops, transcendentals=0,
                                          bytes_accessed=bytes_accessed),
        )(*operands)

    try:
        out = _call(True)     # resident weights single-buffered (1x VMEM)
    except Exception:
        # Defensive: if pl.Buffered(1) is unsupported by this jax/Mosaic
        # version, fall back to default double-buffered resident blocks.
        out = _call(False)
    return out[:, :n_out]


# ---------------------------------------------------------------------------
# Scalable per-layer fallback: tm x tn x tk matmul with f32 accumulator.
# ---------------------------------------------------------------------------
def _linear_tiled_kernel(x_ref, w_ref, b_ref, o_ref, acc_ref, *, apply_relu):
    @pl.when(pl.program_id(2) == 0)
    def _():
        acc_ref[...] = jnp.zeros_like(acc_ref)

    acc_ref[...] += jnp.dot(x_ref[...], w_ref[...],
                            preferred_element_type=jnp.float32)

    @pl.when(pl.program_id(2) == pl.num_programs(2) - 1)
    def _():
        y = acc_ref[...] + b_ref[...]
        if apply_relu:
            y = jnp.maximum(y, 0.0)
        o_ref[...] = y.astype(o_ref.dtype)


def linear_pallas_tiled(x, w, b, *, apply_relu, compute_dtype=None,
                        out_dtype=None, tm=256, tn=512, tk=512):
    """One Linear (+ optional ReLU) with K/N tiling; used when the weights are
    too large to keep resident in VMEM."""
    M, K = x.shape
    Kw, N = w.shape
    assert K == Kw
    if compute_dtype is None:
        compute_dtype = x.dtype
    if out_dtype is None:
        out_dtype = x.dtype

    tm = max(128, min(tm, _round_up(M, LANE)))
    tn = min(tn, _round_up(N, LANE))
    tk = min(tk, _round_up(K, LANE))
    N_pad, K_pad = _round_up(N, tn), _round_up(K, tk)

    # Contraction dim MUST be zero-padded (garbage would feed the accumulator).
    x_p = x.astype(compute_dtype)
    if K_pad != K:
        x_p = jnp.pad(x_p, ((0, 0), (0, K_pad - K)))
    w_p = w.astype(compute_dtype)
    if K_pad != K or N_pad != N:
        w_p = jnp.pad(w_p, ((0, K_pad - K), (0, N_pad - N)))
    b_p = jnp.pad(b.astype(jnp.float32), (0, N_pad - N)).reshape(1, N_pad)

    cdt = jnp.dtype(compute_dtype).itemsize
    odt = jnp.dtype(out_dtype).itemsize
    est = (2 * (tm * tk + tk * tn) * cdt + 2 * tm * tn * odt
           + tm * tn * 4 + 4 * tn * 4 + (2 << 20))
    vmem_limit = int(min(_vmem_budget_bytes(), max(est + (8 << 20), 32 << 20)))

    kernel = functools.partial(_linear_tiled_kernel, apply_relu=apply_relu)
    out = pl.pallas_call(
        kernel,
        out_shape=jax.ShapeDtypeStruct((M, N_pad), out_dtype),
        grid_spec=pltpu.PrefetchScalarGridSpec(
            num_scalar_prefetch=0,
            grid=(pl.cdiv(M, tm), N_pad // tn, K_pad // tk),
            in_specs=[
                pl.BlockSpec((tm, tk), lambda i, j, k: (i, k)),
                pl.BlockSpec((tk, tn), lambda i, j, k: (k, j)),
                pl.BlockSpec((1, tn), lambda i, j, k: (0, j)),
            ],
            out_specs=pl.BlockSpec((tm, tn), lambda i, j, k: (i, j)),
            scratch_shapes=[pltpu.VMEM((tm, tn), jnp.float32)],
        ),
        compiler_params=pltpu.CompilerParams(
            dimension_semantics=("parallel", "parallel", "arbitrary"),
            vmem_limit_bytes=vmem_limit),
        cost_estimate=pl.CostEstimate(
            flops=int(2 * M * K_pad * N_pad), transcendentals=0,
            bytes_accessed=int(x_p.size * cdt + w_p.size * cdt
                               + b_p.size * 4 + M * N_pad * odt)),
    )(x_p, w_p, b_p)
    return out[:, :N]


def mlp_forward_tiled(params, x, *, compute_dtype=None):
    """Per-layer K/N-tiled MLP; inter-layer activations stay in the compute
    dtype (bf16 halves inter-layer HBM traffic on the bf16 path)."""
    if compute_dtype is None:
        compute_dtype = x.dtype
    num_layers = len(params)
    out_dtype = x.dtype
    h = x
    for i, (w, b) in enumerate(params):
        last = i == num_layers - 1
        h = linear_pallas_tiled(h, w, b, apply_relu=not last,
                                compute_dtype=compute_dtype,
                                out_dtype=out_dtype if last else compute_dtype)
    return h


# ---------------------------------------------------------------------------
# Params / reference
# ---------------------------------------------------------------------------
def init_mlp_params(key, input_dim, hidden_dim, output_dim, num_layers,
                    dtype=jnp.float32):
    """Deterministic synthetic init matching nn.Linear shapes (BN=False path)."""
    h = [hidden_dim] * (num_layers - 1)
    dims_in = [input_dim] + h
    dims_out = h + [output_dim]
    params = []
    for n_in, n_out in zip(dims_in, dims_out):
        key, kw, kb = jax.random.split(key, 3)
        bound = 1.0 / jnp.sqrt(n_in)
        # stored as (in, out) == PyTorch weight.T
        w = jax.random.uniform(kw, (n_in, n_out), dtype, -bound, bound)
        b = jax.random.uniform(kb, (n_out,), dtype, -bound, bound)
        params.append((w, b))
    return params


def mlp_reference(params, x):
    num_layers = len(params)
    for i, (w, b) in enumerate(params):
        x = x @ w + b
        if i < num_layers - 1:
            x = jnp.maximum(x, 0.0)
    return x


if __name__ == "__main__":
    input_dim, hidden_dim, output_dim, num_layers = 32, 32, 16, 3
    batch = 16

    key = jax.random.PRNGKey(0)
    key, kx = jax.random.split(key)
    x = jax.random.normal(kx, (batch, input_dim), jnp.float32)
    params = init_mlp_params(key, input_dim, hidden_dim, output_dim, num_layers)

    ref = mlp_reference(params, x)

    # 1) Fused single-kernel MLP, f32 compute, params prepared once.
    prep_f32 = prepare_mlp_params(params, compute_dtype=jnp.float32)
    out = jax.block_until_ready(mlp_forward(prep_f32, x))
    assert out.shape == (batch, output_dim)
    assert jnp.allclose(out, ref, atol=1e-5, rtol=1e-5)

    # 2) Fused MLP with bf16 compute (MXU fast path on v5e/v6e/v7x), f32 acc.
    prep_bf16 = prepare_mlp_params(params, compute_dtype=jnp.bfloat16)
    out_bf16 = jax.block_until_ready(mlp_forward(prep_bf16, x))
    assert out_bf16.shape == (batch, output_dim)
    assert jnp.allclose(out_bf16.astype(jnp.float32), ref, atol=1e-1, rtol=1e-1)

    # 3) Per-layer K/N-tiled fallback path (for hidden dims too big to reside).
    out_tiled = jax.block_until_ready(mlp_forward_tiled(params, x))
    assert out_tiled.shape == (batch, output_dim)
    assert jnp.allclose(out_tiled, ref, atol=1e-5, rtol=1e-5)

    print("KERNEL_OK")
</pallas_src>

<mosaic_0001>
module attributes {stable_mosaic.version = 11 : i64} {
  func.func @_fused_mlp_kernel(%arg0: i32, %arg1: memref<128x128xf32, #tpu.memory_space<vmem>>, %arg2: memref<128x128xf32, #tpu.memory_space<vmem>>, %arg3: memref<1x128xf32, #tpu.memory_space<vmem>>, %arg4: memref<128x128xf32, #tpu.memory_space<vmem>>, %arg5: memref<1x128xf32, #tpu.memory_space<vmem>>, %arg6: memref<128x128xf32, #tpu.memory_space<vmem>>, %arg7: memref<1x128xf32, #tpu.memory_space<vmem>>, %arg8: memref<128x128xf32, #tpu.memory_space<vmem>>) attributes {dimension_semantics = [#tpu.dimension_semantics<parallel>], iteration_bounds = array<i64: 1>, scalar_prefetch = 0 : i64, scratch_operands = 0 : i64, tpu.core_type = #tpu.core_type<tc>, window_params = [{transform_indices = @transform_0, window_bounds = array<i64: 128, 128>}, {pipeline_mode = #tpu.pipeline_mode<synchronous>, transform_indices = @transform_1, window_bounds = array<i64: 128, 128>}, {pipeline_mode = #tpu.pipeline_mode<synchronous>, transform_indices = @transform_2, window_bounds = array<i64: 1, 128>}, {pipeline_mode = #tpu.pipeline_mode<synchronous>, transform_indices = @transform_3, window_bounds = array<i64: 128, 128>}, {pipeline_mode = #tpu.pipeline_mode<synchronous>, transform_indices = @transform_4, window_bounds = array<i64: 1, 128>}, {pipeline_mode = #tpu.pipeline_mode<synchronous>, transform_indices = @transform_5, window_bounds = array<i64: 128, 128>}, {pipeline_mode = #tpu.pipeline_mode<synchronous>, transform_indices = @transform_6, window_bounds = array<i64: 1, 128>}, {transform_indices = @transform_7, window_bounds = array<i64: 128, 128>}]} {
    %c0 = arith.constant 0 : index
    %c0_0 = arith.constant 0 : index
    %0 = vector.load %arg1[%c0, %c0_0] : memref<128x128xf32, #tpu.memory_space<vmem>>, vector<128x128xf32>
    %c0_1 = arith.constant 0 : index
    %c0_2 = arith.constant 0 : index
    %1 = vector.load %arg2[%c0_1, %c0_2] : memref<128x128xf32, #tpu.memory_space<vmem>>, vector<128x128xf32>
    %c0_3 = arith.constant 0 : index
    %c0_4 = arith.constant 0 : index
    %2 = vector.load %arg3[%c0_3, %c0_4] : memref<1x128xf32, #tpu.memory_space<vmem>>, vector<1x128xf32>
    %cst = arith.constant dense<0.000000e+00> : vector<128x128xf32>
    %3 = tpu.matmul %0, %1, %cst {dimension_numbers = #tpu.dot_dimension_numbers<[1], [0], [0], [1], [0, 0, 1, 1], [], []>} : vector<128x128xf32>, vector<128x128xf32>, vector<128x128xf32> -> vector<128x128xf32>
    %4 = vector.broadcast %2 : vector<1x128xf32> to vector<128x128xf32>
    %5 = arith.addf %3, %4 : vector<128x128xf32>
    %cst_5 = arith.constant 0.000000e+00 : f32
    %6 = vector.broadcast %cst_5 : f32 to vector<128x128xf32>
    %7 = arith.maximumf %5, %6 : vector<128x128xf32>
    %c0_6 = arith.constant 0 : index
    %c0_7 = arith.constant 0 : index
    %8 = vector.load %arg4[%c0_6, %c0_7] : memref<128x128xf32, #tpu.memory_space<vmem>>, vector<128x128xf32>
    %c0_8 = arith.constant 0 : index
    %c0_9 = arith.constant 0 : index
    %9 = vector.load %arg5[%c0_8, %c0_9] : memref<1x128xf32, #tpu.memory_space<vmem>>, vector<1x128xf32>
    %cst_10 = arith.constant dense<0.000000e+00> : vector<128x128xf32>
    %10 = tpu.matmul %7, %8, %cst_10 {dimension_numbers = #tpu.dot_dimension_numbers<[1], [0], [0], [1], [0, 0, 1, 1], [], []>} : vector<128x128xf32>, vector<128x128xf32>, vector<128x128xf32> -> vector<128x128xf32>
    %11 = vector.broadcast %9 : vector<1x128xf32> to vector<128x128xf32>
    %12 = arith.addf %10, %11 : vector<128x128xf32>
    %cst_11 = arith.constant 0.000000e+00 : f32
    %13 = vector.broadcast %cst_11 : f32 to vector<128x128xf32>
    %14 = arith.maximumf %12, %13 : vector<128x128xf32>
    %c0_12 = arith.constant 0 : index
    %c0_13 = arith.constant 0 : index
    %15 = vector.load %arg6[%c0_12, %c0_13] : memref<128x128xf32, #tpu.memory_space<vmem>>, vector<128x128xf32>
    %c0_14 = arith.constant 0 : index
    %c0_15 = arith.constant 0 : index
    %16 = vector.load %arg7[%c0_14, %c0_15] : memref<1x128xf32, #tpu.memory_space<vmem>>, vector<1x128xf32>
    %cst_16 = arith.constant dense<0.000000e+00> : vector<128x128xf32>
    %17 = tpu.matmul %14, %15, %cst_16 {dimension_numbers = #tpu.dot_dimension_numbers<[1], [0], [0], [1], [0, 0, 1, 1], [], []>} : vector<128x128xf32>, vector<128x128xf32>, vector<128x128xf32> -> vector<128x128xf32>
    %18 = vector.broadcast %16 : vector<1x128xf32> to vector<128x128xf32>
    %19 = arith.addf %17, %18 : vector<128x128xf32>
    %c0_17 = arith.constant 0 : index
    %c0_18 = arith.constant 0 : index
    %20 = vector.load %arg8[%c0_17, %c0_18] : memref<128x128xf32, #tpu.memory_space<vmem>>, vector<128x128xf32>
    tpu.vector_store %arg8[%c0_17, %c0_18], %19 {strides = array<i32>} : memref<128x128xf32, #tpu.memory_space<vmem>>, vector<128x128xf32>,
    return
  }
  func.func @transform_0(%arg0: i32) -> (i32, i32) {
    %c0_i32 = arith.constant 0 : i32
    %c0_i32_0 = arith.constant 0 : i32
    return %arg0, %c0_i32 : i32, i32
  }
  func.func @transform_1(%arg0: i32) -> (i32, i32) {
    %c0_i32 = arith.constant 0 : i32
    %c0_i32_0 = arith.constant 0 : i32
    %c0_i32_1 = arith.constant 0 : i32
    return %c0_i32, %c0_i32_0 : i32, i32
  }
  func.func @transform_2(%arg0: i32) -> (i32, i32) {
    %c0_i32 = arith.constant 0 : i32
    %c0_i32_0 = arith.constant 0 : i32
    %c0_i32_1 = arith.constant 0 : i32
    return %c0_i32, %c0_i32_0 : i32, i32
  }
  func.func @transform_3(%arg0: i32) -> (i32, i32) {
    %c0_i32 = arith.constant 0 : i32
    %c0_i32_0 = arith.constant 0 : i32
    %c0_i32_1 = arith.constant 0 : i32
    return %c0_i32, %c0_i32_0 : i32, i32
  }
  func.func @transform_4(%arg0: i32) -> (i32, i32) {
    %c0_i32 = arith.constant 0 : i32
    %c0_i32_0 = arith.constant 0 : i32
    %c0_i32_1 = arith.constant 0 : i32
    return %c0_i32, %c0_i32_0 : i32, i32
  }
  func.func @transform_5(%arg0: i32) -> (i32, i32) {
    %c0_i32 = arith.constant 0 : i32
    %c0_i32_0 = arith.constant 0 : i32
    %c0_i32_1 = arith.constant 0 : i32
    return %c0_i32, %c0_i32_0 : i32, i32
  }
  func.func @transform_6(%arg0: i32) -> (i32, i32) {
    %c0_i32 = arith.constant 0 : i32
    %c0_i32_0 = arith.constant 0 : i32
    %c0_i32_1 = arith.constant 0 : i32
    return %c0_i32, %c0_i32_0 : i32, i32
  }
  func.func @transform_7(%arg0: i32) -> (i32, i32) {
    %c0_i32 = arith.constant 0 : i32
    %c0_i32_0 = arith.constant 0 : i32
    return %arg0, %c0_i32 : i32, i32
  }
}

module attributes {stable_mosaic.version = 11 : i64} {
  func.func @_fused_mlp_kernel(%arg0: i32, %arg1: memref<128x128xf32, #tpu.memory_space<vmem>>, %arg2: memref<128x128xf32, #tpu.memory_space<vmem>>, %arg3: memref<1x128xf32, #tpu.memory_space<vmem>>, %arg4: memref<128x128xf32, #tpu.memory_space<vmem>>, %arg5: memref<1x128xf32, #tpu.memory_space<vmem>>, %arg6: memref<128x128xf32, #tpu.memory_space<vmem>>, %arg7: memref<1x128xf32, #tpu.memory_space<vmem>>, %arg8: memref<128x128xf32, #tpu.memory_space<vmem>>) attributes {dimension_semantics = [#tpu.dimension_semantics<parallel>], iteration_bounds = array<i64: 1>, scalar_prefetch = 0 : i64, scratch_operands = 0 : i64, tpu.core_type = #tpu.core_type<tc>, window_params = [{transform_indices = @transform_0, window_bounds = array<i64: 128, 128>}, {pipeline_mode = #tpu.pipeline_mode<synchronous>, transform_indices = @transform_1, window_bounds = array<i64: 128, 128>}, {pipeline_mode = #tpu.pipeline_mode<synchronous>, transform_indices = @transform_2, window_bounds = array<i64: 1, 128>}, {pipeline_mode = #tpu.pipeline_mode<synchronous>, transform_indices = @transform_3, window_bounds = array<i64: 128, 128>}, {pipeline_mode = #tpu.pipeline_mode<synchronous>, transform_indices = @transform_4, window_bounds = array<i64: 1, 128>}, {pipeline_mode = #tpu.pipeline_mode<synchronous>, transform_indices = @transform_5, window_bounds = array<i64: 128, 128>}, {pipeline_mode = #tpu.pipeline_mode<synchronous>, transform_indices = @transform_6, window_bounds = array<i64: 1, 128>}, {transform_indices = @transform_7, window_bounds = array<i64: 128, 128>}]} {
    %c0 = arith.constant 0 : index
    %c0_0 = arith.constant 0 : index
    %0 = vector.load %arg1[%c0, %c0_0] : memref<128x128xf32, #tpu.memory_space<vmem>>, vector<128x128xf32>
    %c0_1 = arith.constant 0 : index
    %c0_2 = arith.constant 0 : index
    %1 = vector.load %arg2[%c0_1, %c0_2] : memref<128x128xf32, #tpu.memory_space<vmem>>, vector<128x128xf32>
    %c0_3 = arith.constant 0 : index
    %c0_4 = arith.constant 0 : index
    %2 = vector.load %arg3[%c0_3, %c0_4] : memref<1x128xf32, #tpu.memory_space<vmem>>, vector<1x128xf32>
    %cst = arith.constant dense<0.000000e+00> : vector<128x128xf32>
    %3 = tpu.matmul %0, %1, %cst {dimension_numbers = #tpu.dot_dimension_numbers<[1], [0], [0], [1], [0, 0, 1, 1], [], []>} : vector<128x128xf32>, vector<128x128xf32>, vector<128x128xf32> -> vector<128x128xf32>
    %4 = vector.broadcast %2 : vector<1x128xf32> to vector<128x128xf32>
    %5 = arith.addf %3, %4 : vector<128x128xf32>
    %cst_5 = arith.constant 0.000000e+00 : f32
    %6 = vector.broadcast %cst_5 : f32 to vector<128x128xf32>
    %7 = arith.maximumf %5, %6 : vector<128x128xf32>
    %c0_6 = arith.constant 0 : index
    %c0_7 = arith.constant 0 : index
    %8 = vector.load %arg4[%c0_6, %c0_7] : memref<128x128xf32, #tpu.memory_space<vmem>>, vector<128x128xf32>
    %c0_8 = arith.constant 0 : index
    %c0_9 = arith.constant 0 : index
    %9 = vector.load %arg5[%c0_8, %c0_9] : memref<1x128xf32, #tpu.memory_space<vmem>>, vector<1x128xf32>
    %cst_10 = arith.constant dense<0.000000e+00> : vector<128x128xf32>
    %10 = tpu.matmul %7, %8, %cst_10 {dimension_numbers = #tpu.dot_dimension_numbers<[1], [0], [0], [1], [0, 0, 1, 1], [], []>} : vector<128x128xf32>, vector<128x128xf32>, vector<128x128xf32> -> vector<128x128xf32>
    %11 = vector.broadcast %9 : vector<1x128xf32> to vector<128x128xf32>
    %12 = arith.addf %10, %11 : vector<128x128xf32>
    %cst_11 = arith.constant 0.000000e+00 : f32
    %13 = vector.broadcast %cst_11 : f32 to vector<128x128xf32>
    %14 = arith.maximumf %12, %13 : vector<128x128xf32>
    %c0_12 = arith.constant 0 : index
    %c0_13 = arith.constant 0 : index
    %15 = vector.load %arg6[%c0_12, %c0_13] : memref<128x128xf32, #tpu.memory_space<vmem>>, vector<128x128xf32>
    %c0_14 = arith.constant 0 : index
    %c0_15 = arith.constant 0 : index
    %16 = vector.load %arg7[%c0_14, %c0_15] : memref<1x128xf32, #tpu.memory_space<vmem>>, vector<1x128xf32>
    %cst_16 = arith.constant dense<0.000000e+00> : vector<128x128xf32>
    %17 = tpu.matmul %14, %15, %cst_16 {dimension_numbers = #tpu.dot_dimension_numbers<[1], [0], [0], [1], [0, 0, 1, 1], [], []>} : vector<128x128xf32>, vector<128x128xf32>, vector<128x128xf32> -> vector<128x128xf32>
    %18 = vector.broadcast %16 : vector<1x128xf32> to vector<128x128xf32>
    %19 = arith.addf %17, %18 : vector<128x128xf32>
    %c0_17 = arith.constant 0 : index
    %c0_18 = arith.constant 0 : index
    %20 = vector.load %arg8[%c0_17, %c0_18] : memref<128x128xf32, #tpu.memory_space<vmem>>, vector<128x128xf32>
    tpu.vector_store %arg8[%c0_17, %c0_18], %19 {strides = array<i32>} : memref<128x128xf32, #tpu.memory_space<vmem>>, vector<128x128xf32>,
    return
  }
  func.func @transform_0(%arg0: i32) -> (i32, i32) {
    %c0_i32 = arith.constant 0 : i32
    %c0_i32_0 = arith.constant 0 : i32
    return %arg0, %c0_i32 : i32, i32
  }
  func.func @transform_1(%arg0: i32) -> (i32, i32) {
    %c0_i32 = arith.constant 0 : i32
    %c0_i32_0 = arith.constant 0 : i32
    %c0_i32_1 = arith.constant 0 : i32
    return %c0_i32, %c0_i32_0 : i32, i32
  }
  func.func @transform_2(%arg0: i32) -> (i32, i32) {
    %c0_i32 = arith.constant 0 : i32
    %c0_i32_0 = arith.constant 0 : i32
    %c0_i32_1 = arith.constant 0 : i32
    return %c0_i32, %c0_i32_0 : i32, i32
  }
  func.func @transform_3(%arg0: i32) -> (i32, i32) {
    %c0_i32 = arith.constant 0 : i32
    %c0_i32_0 = arith.constant 0 : i32
    %c0_i32_1 = arith.constant 0 : i32
    return %c0_i32, %c0_i32_0 : i32, i32
  }
  func.func @transform_4(%arg0: i32) -> (i32, i32) {
    %c0_i32 = arith.constant 0 : i32
    %c0_i32_0 = arith.constant 0 : i32
    %c0_i32_1 = arith.constant 0 : i32
    return %c0_i32, %c0_i32_0 : i32, i32
  }
  func.func @transform_5(%arg0: i32) -> (i32, i32) {
    %c0_i32 = arith.constant 0 : i32
    %c0_i32_0 = arith.constant 0 : i32
    %c0_i32_1 = arith.constant 0 : i32
    return %c0_i32, %c0_i32_0 : i32, i32
  }
  func.func @transform_6(%arg0: i32) -> (i32, i32) {
    %c0_i32 = arith.constant 0 : i32
    %c0_i32_0 = arith.constant 0 : i32
    %c0_i32_1 = arith.constant 0 : i32
    return %c0_i32, %c0_i32_0 : i32, i32
  }
  func.func @transform_7(%arg0: i32) -> (i32, i32) {
    %c0_i32 = arith.constant 0 : i32
    %c0_i32_0 = arith.constant 0 : i32
    return %arg0, %c0_i32 : i32, i32
  }
}

</mosaic_0001>

<llo_original>
// kernel: tpu_custom_call.1
$region0: #{tpu_custom_call.1}
  #allocation0 [shape = 'u32[]', space=smem, size = 0x4, offset = 0x4, fixed_abs, tag = 'smem constant byte address 0x4 - core index']
  #allocation1 [shape = 'u32[72,128]{1,0:T(1,128)}', space=vmem, size = 0x9000, scoped, tag = 'internal scratch']
  %s0 = inlined_call_operand.hbm [shape: f32[16,128], index: 0, kind: input, shape index: {}]
  %s1 = inlined_call_operand.hbm [shape: f32[128,128], index: 1, kind: input, shape index: {}]
  %s2 = inlined_call_operand.vmem [shape: f32[1,128], index: 2, kind: input, shape index: {}]
  %s3 = inlined_call_operand.hbm [shape: f32[128,128], index: 3, kind: input, shape index: {}]
  %s4 = inlined_call_operand.vmem [shape: f32[1,128], index: 4, kind: input, shape index: {}]
  %s5 = inlined_call_operand.hbm [shape: f32[128,128], index: 5, kind: input, shape index: {}]
  %s6 = inlined_call_operand.vmem [shape: f32[1,128], index: 6, kind: input, shape index: {}]
  %s7 = inlined_call_operand.hbm [shape: f32[16,128], index: 7, kind: output, shape index: {}]
  %s8 = sld [smem:[#allocation0]]
  $region54: #{tpu_custom_call.1} parent=0
    _
  %s10 = ssub.s32 1, %s8
  %s11 = scalar_select 0, %s10, %s8
  $region1: #{tpu_custom_call.1} parent=0
    #allocation2 [shape = 'u8[65536]{0}', space=vmem, size = 0x10000, scoped, tag = 'input window, operand 0, single buffered']
    #allocation3 [shape = 's32[1]{0}', space=sflag, size = 0x4, scoped, tag = 'scoped memory for tpu_custom_call.1']
    #allocation4 [shape = 's32[1]{0}', space=sflag, size = 0x4, scoped, tag = 'scoped memory for tpu_custom_call.1']
    #allocation5 [shape = 'u8[65536]{0}', space=vmem, size = 0x10000, scoped, tag = 'input window, operand 1, single buffered']
    #allocation6 [shape = 's32[1]{0}', space=sflag, size = 0x4, scoped, tag = 'scoped memory for tpu_custom_call.1']
    #allocation7 [shape = 'u8[65536]{0}', space=vmem, size = 0x10000, scoped, tag = 'input window, operand 3, single buffered']
    #allocation8 [shape = 'u8[65536]{0}', space=vmem, size = 0x10000, scoped, tag = 'input window, operand 5, single buffered']
    #allocation9 [shape = 's32[1]{0}', space=sflag, size = 0x4, scoped, tag = 'scoped memory for tpu_custom_call.1']
    #allocation10 [shape = 'u8[65536]{0}', space=vmem, size = 0x10000, scoped, tag = 'output window, operand 0, single buffered']
    %12 = vsyncpa [#allocation3], 0
    %13 = vsyncpa [#allocation6], 0
    %14 = vsyncpa [#allocation9], 0
    %15 = vsyncpa [#allocation4], 0
    // Predicated region
    $region2: #{tpu_custom_call.1} parent=1 // pred_check
      _
    $region3: #{tpu_custom_call.1} parent=1 // pred_check_branch
      %17 = sbr.rel (0) target = $region5
    $region4: #{tpu_custom_call.1} parent=1 // pred_region
      %19 = vsyncadd [#allocation3], 1792
      %s20 = sshll.u32 %s0, 4
      %s21 = int_to_ptr.hbm [resolvable:$true] %s20
      %s22 = sshll.u32 [#allocation2], 4
      %s23 = int_to_ptr.vmem [resolvable:$true] %s22
      %28 = dma.hbm_to_vmem [thread:$0]  %s21, 256, %s23, [#allocation3], 128, 128, 8
    $region5: #{tpu_custom_call.1} parent=1 // pred_fallthru
      _
    // Predicated region
    $region6: #{tpu_custom_call.1} parent=1 // pred_check
      _
    $region7: #{tpu_custom_call.1} parent=1 // pred_check_branch
      %30 = sbr.rel (0) target = $region9
    $region8: #{tpu_custom_call.1} parent=1 // pred_region
      %32 = vsyncadd [#allocation6], 0
      %s33 = sshll.u32 %s1, 4
      %s34 = int_to_ptr.hbm [resolvable:$true] %s33
      %s35 = sshll.u32 [#allocation5], 4
      %s36 = int_to_ptr.vmem [resolvable:$true] %s35
      %41 = dma.hbm_to_vmem [thread:$0]  %s34, 2048, %s36, [#allocation6], 128, 128, 8
    $region9: #{tpu_custom_call.1} parent=1 // pred_fallthru
      _
    // Predicated region
    $region10: #{tpu_custom_call.1} parent=1 // pred_check
      _
    $region11: #{tpu_custom_call.1} parent=1 // pred_check_branch
      %43 = sbr.rel (0) target = $region13
    $region12: #{tpu_custom_call.1} parent=1 // pred_region
      _
    $region13: #{tpu_custom_call.1} parent=1 // pred_fallthru
      _
    // Predicated region
    $region14: #{tpu_custom_call.1} parent=1 // pred_check
      _
    $region15: #{tpu_custom_call.1} parent=1 // pred_check_branch
      %45 = sbr.rel (0) target = $region17
    $region16: #{tpu_custom_call.1} parent=1 // pred_region
      %47 = vsyncadd [#allocation6], 0
      %s48 = sshll.u32 %s3, 4
      %s49 = int_to_ptr.hbm [resolvable:$true] %s48
      %s50 = sshll.u32 [#allocation7], 4
      %s51 = int_to_ptr.vmem [resolvable:$true] %s50
      %56 = dma.hbm_to_vmem [thread:$0]  %s49, 2048, %s51, [#allocation6], 128, 128, 8
    $region17: #{tpu_custom_call.1} parent=1 // pred_fallthru
      _
    // Predicated region
    $region18: #{tpu_custom_call.1} parent=1 // pred_check
      _
    $region19: #{tpu_custom_call.1} parent=1 // pred_check_branch
      %58 = sbr.rel (0) target = $region21
    $region20: #{tpu_custom_call.1} parent=1 // pred_region
      _
    $region21: #{tpu_custom_call.1} parent=1 // pred_fallthru
      _
    // Predicated region
    $region22: #{tpu_custom_call.1} parent=1 // pred_check
      _
    $region23: #{tpu_custom_call.1} parent=1 // pred_check_branch
      %60 = sbr.rel (0) target = $region25
    $region24: #{tpu_custom_call.1} parent=1 // pred_region
      %62 = vsyncadd [#allocation9], 0
      %s63 = sshll.u32 %s5, 4
      %s64 = int_to_ptr.hbm [resolvable:$true] %s63
      %s65 = sshll.u32 [#allocation8], 4
      %s66 = int_to_ptr.vmem [resolvable:$true] %s65
      %71 = dma.hbm_to_vmem [thread:$0]  %s64, 2048, %s66, [#allocation9], 128, 128, 8
    $region25: #{tpu_custom_call.1} parent=1 // pred_fallthru
      _
    // Predicated region
    $region26: #{tpu_custom_call.1} parent=1 // pred_check
      _
    $region27: #{tpu_custom_call.1} parent=1 // pred_check_branch
      %73 = sbr.rel (0) target = $region29
    $region28: #{tpu_custom_call.1} parent=1 // pred_region
      _
    $region29: #{tpu_custom_call.1} parent=1 // pred_fallthru
      _
    // Predicated region
    $region30: #{tpu_custom_call.1} parent=1 // pred_check
      _
    $region31: #{tpu_custom_call.1} parent=1 // pred_check_branch
      %75 = sbr.rel (0) target = $region33
    $region32: #{tpu_custom_call.1} parent=1 // pred_region
      %77 = dma.done [#allocation3], 2048
    $region33: #{tpu_custom_call.1} parent=1 // pred_fallthru
      _
    // Predicated region
    $region34: #{tpu_custom_call.1} parent=1 // pred_check
      _
    $region35: #{tpu_custom_call.1} parent=1 // pred_check_branch
      %79 = sbr.rel (0) target = $region37
    $region36: #{tpu_custom_call.1} parent=1 // pred_region
      %81 = dma.done [#allocation6], 2048
    $region37: #{tpu_custom_call.1} parent=1 // pred_fallthru
      _
    // Predicated region
    $region38: #{tpu_custom_call.1} parent=1 // pred_check
      _
    $region39: #{tpu_custom_call.1} parent=1 // pred_check_branch
      %83 = sbr.rel (0) target = $region41
    $region40: #{tpu_custom_call.1} parent=1 // pred_region
      %85 = dma.done [#allocation6], 2048
    $region41: #{tpu_custom_call.1} parent=1 // pred_fallthru
      _
    // Predicated region
    $region42: #{tpu_custom_call.1} parent=1 // pred_check
      _
    $region43: #{tpu_custom_call.1} parent=1 // pred_check_branch
      %87 = sbr.rel (0) target = $region45
    $region44: #{tpu_custom_call.1} parent=1 // pred_region
      %89 = dma.done [#allocation9], 2048
    $region45: #{tpu_custom_call.1} parent=1 // pred_fallthru
      _
    %v90 = vld [vmem:[#allocation2] sm:$0xff]
    %v91 = vld [vmem:[#allocation2 + $0x8] sm:$0xff]
    %v92 = vld [vmem:[#allocation2 + $0x10] sm:$0xff]
    %v93 = vld [vmem:[#allocation2 + $0x18] sm:$0xff]
    %v94 = vld [vmem:[#allocation2 + $0x20] sm:$0xff]
    %v95 = vld [vmem:[#allocation2 + $0x28] sm:$0xff]
    %v96 = vld [vmem:[#allocation2 + $0x30] sm:$0xff]
    %v97 = vld [vmem:[#allocation2 + $0x38] sm:$0xff]
    %v98 = vld [vmem:[#allocation2 + $0x40] sm:$0xff]
    %v99 = vld [vmem:[#allocation2 + $0x48] sm:$0xff]
    %v100 = vld [vmem:[#allocation2 + $0x50] sm:$0xff]
    %v101 = vld [vmem:[#allocation2 + $0x58] sm:$0xff]
    %v102 = vld [vmem:[#allocation2 + $0x60] sm:$0xff]
    %v103 = vld [vmem:[#allocation2 + $0x68] sm:$0xff]
    %v104 = vld [vmem:[#allocation2 + $0x70] sm:$0xff]
    %v105 = vld [vmem:[#allocation2 + $0x78] sm:$0xff]
    %v106 = vld [vmem:[#allocation5] sm:$0xff]
    %v107 = vld [vmem:[#allocation5 + $0x8] sm:$0xff]
    %v108 = vld [vmem:[#allocation5 + $0x10] sm:$0xff]
    %v109 = vld [vmem:[#allocation5 + $0x18] sm:$0xff]
    %v110 = vld [vmem:[#allocation5 + $0x20] sm:$0xff]
    %v111 = vld [vmem:[#allocation5 + $0x28] sm:$0xff]
    %v112 = vld [vmem:[#allocation5 + $0x30] sm:$0xff]
    %v113 = vld [vmem:[#allocation5 + $0x38] sm:$0xff]
    %v114 = vld [vmem:[#allocation5 + $0x40] sm:$0xff]
    %v115 = vld [vmem:[#allocation5 + $0x48] sm:$0xff]
    %v116 = vld [vmem:[#allocation5 + $0x50] sm:$0xff]
    %v117 = vld [vmem:[#allocation5 + $0x58] sm:$0xff]
    %v118 = vld [vmem:[#allocation5 + $0x60] sm:$0xff]
    %v119 = vld [vmem:[#allocation5 + $0x68] sm:$0xff]
    %v120 = vld [vmem:[#allocation5 + $0x70] sm:$0xff]
    %v121 = vld [vmem:[#allocation5 + $0x78] sm:$0xff]
    %v122 = vld [vmem:[%s2] sm:$0x1]
    %v124 = vperm.slane %v122, 0
    %126 = vmatpush.msra.mxu0 %v121
    %127 = vmatpush.msra.mxu0 %v120
    %128 = vmatpush.msra.mxu0 %v119
    %129 = vmatpush.msra.mxu0 %v118
    %130 = vmatpush.msra.mxu0 %v117
    %131 = vmatpush.msra.mxu0 %v116
    %132 = vmatpush.msra.mxu0 %v115
    %133 = vmatpush.msra.mxu0 %v114
    %134 = vmatpush.msra.mxu0 %v113
    %135 = vmatpush.msra.mxu0 %v112
    %136 = vmatpush.msra.mxu0 %v111
    %137 = vmatpush.msra.mxu0 %v110
    %138 = vmatpush.msra.mxu0 %v109
    %139 = vmatpush.msra.mxu0 %v108
    %140 = vmatpush.msra.mxu0 %v107
    %141 = vmatpush.msra.mxu0 %v106
    %142 = vmatmul.f32.gmra.mxu0 %v90
    %v143 = vpop.f32.mrf.mxu0
    %v144 = vadd.f32 %v124, %v143
    %145 = vmatmul.f32.gmra.mxu0 %v91
    %v146 = vpop.f32.mrf.mxu0
    %v147 = vadd.f32 %v124, %v146
    %148 = vmatmul.f32.gmra.mxu0 %v92
    %v149 = vpop.f32.mrf.mxu0
    %v150 = vadd.f32 %v124, %v149
    %151 = vmatmul.f32.gmra.mxu0 %v93
    %v152 = vpop.f32.mrf.mxu0
    %v153 = vadd.f32 %v124, %v152
    %154 = vmatmul.f32.gmra.mxu0 %v94
    %v155 = vpop.f32.mrf.mxu0
    %v156 = vadd.f32 %v124, %v155
    %157 = vmatmul.f32.gmra.mxu0 %v95
    %v158 = vpop.f32.mrf.mxu0
    %v159 = vadd.f32 %v124, %v158
    %160 = vmatmul.f32.gmra.mxu0 %v96
    %v161 = vpop.f32.mrf.mxu0
    %v162 = vadd.f32 %v124, %v161
    %163 = vmatmul.f32.gmra.mxu0 %v97
    %v164 = vpop.f32.mrf.mxu0
    %v165 = vadd.f32 %v124, %v164
    %166 = vmatmul.f32.gmra.mxu0 %v98
    %v167 = vpop.f32.mrf.mxu0
    %v168 = vadd.f32 %v124, %v167
    %169 = vmatmul.f32.gmra.mxu0 %v99
    %v170 = vpop.f32.mrf.mxu0
    %v171 = vadd.f32 %v124, %v170
    %172 = vmatmul.f32.gmra.mxu0 %v100
    %v173 = vpop.f32.mrf.mxu0
    %v174 = vadd.f32 %v124, %v173
    %175 = vmatmul.f32.gmra.mxu0 %v101
    %v176 = vpop.f32.mrf.mxu0
    %v177 = vadd.f32 %v124, %v176
    %178 = vmatmul.f32.gmra.mxu0 %v102
    %v179 = vpop.f32.mrf.mxu0
    %v180 = vadd.f32 %v124, %v179
    %181 = vmatmul.f32.gmra.mxu0 %v103
    %v182 = vpop.f32.mrf.mxu0
    %v183 = vadd.f32 %v124, %v182
    %184 = vmatmul.f32.gmra.mxu0 %v104
    %v185 = vpop.f32.mrf.mxu0
    %v186 = vadd.f32 %v124, %v185
    %187 = vmatmul.f32.gmra.mxu0 %v105
    %v188 = vpop.f32.mrf.mxu0
    %v189 = vadd.f32 %v124, %v188
    %190 = vdwg.mxu0
    %v191 = vmax.f32 %v144, 0.0
    %v192 = vmax.f32 %v147, 0.0
    %v193 = vmax.f32 %v150, 0.0
    %v194 = vmax.f32 %v153, 0.0
    %v195 = vmax.f32 %v156, 0.0
    %v196 = vmax.f32 %v159, 0.0
    %v197 = vmax.f32 %v162, 0.0
    %v198 = vmax.f32 %v165, 0.0
    %v199 = vmax.f32 %v168, 0.0
    %v200 = vmax.f32 %v171, 0.0
    %v201 = vmax.f32 %v174, 0.0
    %v202 = vmax.f32 %v177, 0.0
    %v203 = vmax.f32 %v180, 0.0
    %v204 = vmax.f32 %v183, 0.0
    %v205 = vmax.f32 %v186, 0.0
    %v206 = vmax.f32 %v189, 0.0
    %v207 = vld [vmem:[#allocation7] sm:$0xff]
    %v208 = vld [vmem:[#allocation7 + $0x8] sm:$0xff]
    %v209 = vld [vmem:[#allocation7 + $0x10] sm:$0xff]
    %v210 = vld [vmem:[#allocation7 + $0x18] sm:$0xff]
    %v211 = vld [vmem:[#allocation7 + $0x20] sm:$0xff]
    %v212 = vld [vmem:[#allocation7 + $0x28] sm:$0xff]
    %v213 = vld [vmem:[#allocation7 + $0x30] sm:$0xff]
    %v214 = vld [vmem:[#allocation7 + $0x38] sm:$0xff]
    %v215 = vld [vmem:[#allocation7 + $0x40] sm:$0xff]
    %v216 = vld [vmem:[#allocation7 + $0x48] sm:$0xff]
    %v217 = vld [vmem:[#allocation7 + $0x50] sm:$0xff]
    %v218 = vld [vmem:[#allocation7 + $0x58] sm:$0xff]
    %v219 = vld [vmem:[#allocation7 + $0x60] sm:$0xff]
    %v220 = vld [vmem:[#allocation7 + $0x68] sm:$0xff]
    %v221 = vld [vmem:[#allocation7 + $0x70] sm:$0xff]
    %v222 = vld [vmem:[#allocation7 + $0x78] sm:$0xff]
    %v223 = vld [vmem:[%s4] sm:$0x1]
    %v225 = vperm.slane %v223, 0
    %227 = vmatpush.msra.mxu0 %v222
    %228 = vmatpush.msra.mxu0 %v221
    %229 = vmatpush.msra.mxu0 %v220
    %230 = vmatpush.msra.mxu0 %v219
    %231 = vmatpush.msra.mxu0 %v218
    %232 = vmatpush.msra.mxu0 %v217
    %233 = vmatpush.msra.mxu0 %v216
    %234 = vmatpush.msra.mxu0 %v215
    %235 = vmatpush.msra.mxu0 %v214
    %236 = vmatpush.msra.mxu0 %v213
    %237 = vmatpush.msra.mxu0 %v212
    %238 = vmatpush.msra.mxu0 %v211
    %239 = vmatpush.msra.mxu0 %v210
    %240 = vmatpush.msra.mxu0 %v209
    %241 = vmatpush.msra.mxu0 %v208
    %242 = vmatpush.msra.mxu0 %v207
    %243 = vmatmul.f32.gmra.mxu0 %v191
    %v244 = vpop.f32.mrf.mxu0
    %v245 = vadd.f32 %v225, %v244
    %246 = vmatmul.f32.gmra.mxu0 %v192
    %v247 = vpop.f32.mrf.mxu0
    %v248 = vadd.f32 %v225, %v247
    %249 = vmatmul.f32.gmra.mxu0 %v193
    %v250 = vpop.f32.mrf.mxu0
    %v251 = vadd.f32 %v225, %v250
    %252 = vmatmul.f32.gmra.mxu0 %v194
    %v253 = vpop.f32.mrf.mxu0
    %v254 = vadd.f32 %v225, %v253
    %255 = vmatmul.f32.gmra.mxu0 %v195
    %v256 = vpop.f32.mrf.mxu0
    %v257 = vadd.f32 %v225, %v256
    %258 = vmatmul.f32.gmra.mxu0 %v196
    %v259 = vpop.f32.mrf.mxu0
    %v260 = vadd.f32 %v225, %v259
    %261 = vmatmul.f32.gmra.mxu0 %v197
    %v262 = vpop.f32.mrf.mxu0
    %v263 = vadd.f32 %v225, %v262
    %264 = vmatmul.f32.gmra.mxu0 %v198
    %v265 = vpop.f32.mrf.mxu0
    %v266 = vadd.f32 %v225, %v265
    %267 = vmatmul.f32.gmra.mxu0 %v199
    %v268 = vpop.f32.mrf.mxu0
    %v269 = vadd.f32 %v225, %v268
    %270 = vmatmul.f32.gmra.mxu0 %v200
    %v271 = vpop.f32.mrf.mxu0
    %v272 = vadd.f32 %v225, %v271
    %273 = vmatmul.f32.gmra.mxu0 %v201
    %v274 = vpop.f32.mrf.mxu0
    %v275 = vadd.f32 %v225, %v274
    %276 = vmatmul.f32.gmra.mxu0 %v202
    %v277 = vpop.f32.mrf.mxu0
    %v278 = vadd.f32 %v225, %v277
    %279 = vmatmul.f32.gmra.mxu0 %v203
    %v280 = vpop.f32.mrf.mxu0
    %v281 = vadd.f32 %v225, %v280
    %282 = vmatmul.f32.gmra.mxu0 %v204
    %v283 = vpop.f32.mrf.mxu0
    %v284 = vadd.f32 %v225, %v283
    %285 = vmatmul.f32.gmra.mxu0 %v205
    %v286 = vpop.f32.mrf.mxu0
    %v287 = vadd.f32 %v225, %v286
    %288 = vmatmul.f32.gmra.mxu0 %v206
    %v289 = vpop.f32.mrf.mxu0
    %v290 = vadd.f32 %v225, %v289
    %291 = vdwg.mxu0
    %v292 = vmax.f32 %v245, 0.0
    %v293 = vmax.f32 %v248, 0.0
    %v294 = vmax.f32 %v251, 0.0
    %v295 = vmax.f32 %v254, 0.0
    %v296 = vmax.f32 %v257, 0.0
    %v297 = vmax.f32 %v260, 0.0
    %v298 = vmax.f32 %v263, 0.0
    %v299 = vmax.f32 %v266, 0.0
    %v300 = vmax.f32 %v269, 0.0
    %v301 = vmax.f32 %v272, 0.0
    %v302 = vmax.f32 %v275, 0.0
    %v303 = vmax.f32 %v278, 0.0
    %v304 = vmax.f32 %v281, 0.0
    %v305 = vmax.f32 %v284, 0.0
    %v306 = vmax.f32 %v287, 0.0
    %v307 = vmax.f32 %v290, 0.0
    %v308 = vld [vmem:[#allocation8] sm:$0xff]
    %v309 = vld [vmem:[#allocation8 + $0x8] sm:$0xff]
    %v310 = vld [vmem:[#allocation8 + $0x10] sm:$0xff]
    %v311 = vld [vmem:[#allocation8 + $0x18] sm:$0xff]
    %v312 = vld [vmem:[#allocation8 + $0x20] sm:$0xff]
    %v313 = vld [vmem:[#allocation8 + $0x28] sm:$0xff]
    %v314 = vld [vmem:[#allocation8 + $0x30] sm:$0xff]
    %v315 = vld [vmem:[#allocation8 + $0x38] sm:$0xff]
    %v316 = vld [vmem:[#allocation8 + $0x40] sm:$0xff]
    %v317 = vld [vmem:[#allocation8 + $0x48] sm:$0xff]
    %v318 = vld [vmem:[#allocation8 + $0x50] sm:$0xff]
    %v319 = vld [vmem:[#allocation8 + $0x58] sm:$0xff]
    %v320 = vld [vmem:[#allocation8 + $0x60] sm:$0xff]
    %v321 = vld [vmem:[#allocation8 + $0x68] sm:$0xff]
    %v322 = vld [vmem:[#allocation8 + $0x70] sm:$0xff]
    %v323 = vld [vmem:[#allocation8 + $0x78] sm:$0xff]
    %v324 = vld [vmem:[%s6] sm:$0x1]
    %v326 = vperm.slane %v324, 0
    %328 = vmatpush.msra.mxu0 %v323
    %329 = vmatpush.msra.mxu0 %v322
    %330 = vmatpush.msra.mxu0 %v321
    %331 = vmatpush.msra.mxu0 %v320
    %332 = vmatpush.msra.mxu0 %v319
    %333 = vmatpush.msra.mxu0 %v318
    %334 = vmatpush.msra.mxu0 %v317
    %335 = vmatpush.msra.mxu0 %v316
    %336 = vmatpush.msra.mxu0 %v315
    %337 = vmatpush.msra.mxu0 %v314
    %338 = vmatpush.msra.mxu0 %v313
    %339 = vmatpush.msra.mxu0 %v312
    %340 = vmatpush.msra.mxu0 %v311
    %341 = vmatpush.msra.mxu0 %v310
    %342 = vmatpush.msra.mxu0 %v309
    %343 = vmatpush.msra.mxu0 %v308
    %344 = vmatmul.f32.gmra.mxu0 %v292
    %v345 = vpop.f32.mrf.mxu0
    %v346 = vadd.f32 %v326, %v345
    %347 = vmatmul.f32.gmra.mxu0 %v293
    %v348 = vpop.f32.mrf.mxu0
    %v349 = vadd.f32 %v326, %v348
    %350 = vmatmul.f32.gmra.mxu0 %v294
    %v351 = vpop.f32.mrf.mxu0
    %v352 = vadd.f32 %v326, %v351
    %353 = vmatmul.f32.gmra.mxu0 %v295
    %v354 = vpop.f32.mrf.mxu0
    %v355 = vadd.f32 %v326, %v354
    %356 = vmatmul.f32.gmra.mxu0 %v296
    %v357 = vpop.f32.mrf.mxu0
    %v358 = vadd.f32 %v326, %v357
    %359 = vmatmul.f32.gmra.mxu0 %v297
    %v360 = vpop.f32.mrf.mxu0
    %v361 = vadd.f32 %v326, %v360
    %362 = vmatmul.f32.gmra.mxu0 %v298
    %v363 = vpop.f32.mrf.mxu0
    %v364 = vadd.f32 %v326, %v363
    %365 = vmatmul.f32.gmra.mxu0 %v299
    %v366 = vpop.f32.mrf.mxu0
    %v367 = vadd.f32 %v326, %v366
    %368 = vmatmul.f32.gmra.mxu0 %v300
    %v369 = vpop.f32.mrf.mxu0
    %v370 = vadd.f32 %v326, %v369
    %371 = vmatmul.f32.gmra.mxu0 %v301
    %v372 = vpop.f32.mrf.mxu0
    %v373 = vadd.f32 %v326, %v372
    %374 = vmatmul.f32.gmra.mxu0 %v302
    %v375 = vpop.f32.mrf.mxu0
    %v376 = vadd.f32 %v326, %v375
    %377 = vmatmul.f32.gmra.mxu0 %v303
    %v378 = vpop.f32.mrf.mxu0
    %v379 = vadd.f32 %v326, %v378
    %380 = vmatmul.f32.gmra.mxu0 %v304
    %v381 = vpop.f32.mrf.mxu0
    %v382 = vadd.f32 %v326, %v381
    %383 = vmatmul.f32.gmra.mxu0 %v305
    %v384 = vpop.f32.mrf.mxu0
    %v385 = vadd.f32 %v326, %v384
    %386 = vmatmul.f32.gmra.mxu0 %v306
    %v387 = vpop.f32.mrf.mxu0
    %v388 = vadd.f32 %v326, %v387
    %389 = vmatmul.f32.gmra.mxu0 %v307
    %v390 = vpop.f32.mrf.mxu0
    %v391 = vadd.f32 %v326, %v390
    %392 = vdwg.mxu0
    %393 = vst [vmem:[#allocation10] sm:$0xff] %v346
    %394 = vst [vmem:[#allocation10 + $0x8] sm:$0xff] %v349
    %395 = vst [vmem:[#allocation10 + $0x10] sm:$0xff] %v352
    %396 = vst [vmem:[#allocation10 + $0x18] sm:$0xff] %v355
    %397 = vst [vmem:[#allocation10 + $0x20] sm:$0xff] %v358
    %398 = vst [vmem:[#allocation10 + $0x28] sm:$0xff] %v361
    %399 = vst [vmem:[#allocation10 + $0x30] sm:$0xff] %v364
    %400 = vst [vmem:[#allocation10 + $0x38] sm:$0xff] %v367
    %401 = vst [vmem:[#allocation10 + $0x40] sm:$0xff] %v370
    %402 = vst [vmem:[#allocation10 + $0x48] sm:$0xff] %v373
    %403 = vst [vmem:[#allocation10 + $0x50] sm:$0xff] %v376
    %404 = vst [vmem:[#allocation10 + $0x58] sm:$0xff] %v379
    %405 = vst [vmem:[#allocation10 + $0x60] sm:$0xff] %v382
    %406 = vst [vmem:[#allocation10 + $0x68] sm:$0xff] %v385
    %407 = vst [vmem:[#allocation10 + $0x70] sm:$0xff] %v388
    %408 = vst [vmem:[#allocation10 + $0x78] sm:$0xff] %v391
    // Predicated region
    $region46: #{tpu_custom_call.1} parent=1 // pred_check
      _
    $region47: #{tpu_custom_call.1} parent=1 // pred_check_branch
      %410 = sbr.rel (0) target = $region49
    $region48: #{tpu_custom_call.1} parent=1 // pred_region
      %412 = vsyncadd [#allocation4], 1792
      %s413 = sshll.u32 [#allocation10], 4
      %s414 = int_to_ptr.vmem [resolvable:$true] %s413
      %s415 = sshll.u32 %s7, 4
      %s416 = int_to_ptr.hbm [resolvable:$true] %s415
      %421 = dma.vmem_to_hbm [thread:$0]  %s414, 256, %s416, [#allocation4], 128, 128, 8
    $region49: #{tpu_custom_call.1} parent=1 // pred_fallthru
      _
    // Predicated region
    $region50: #{tpu_custom_call.1} parent=1 // pred_check
      _
    $region51: #{tpu_custom_call.1} parent=1 // pred_check_branch
      %423 = sbr.rel (0) target = $region53
    $region52: #{tpu_custom_call.1} parent=1 // pred_region
      %425 = dma.done [#allocation4], 2048
    $region53: #{tpu_custom_call.1} parent=1 // pred_fallthru
      _
    %426 = vsyncpa [#allocation3], 1
    %427 = vsyncpa [#allocation6], 1
    %428 = vsyncpa [#allocation9], 1
    %429 = vsyncpa [#allocation4], 1

// kernel: tpu_custom_call.1
$region0: #{tpu_custom_call.1}
  #allocation0 [shape = 'u32[]', space=smem, size = 0x4, offset = 0x4, fixed_abs, tag = 'smem constant byte address 0x4 - core index']
  #allocation1 [shape = 'u32[72,128]{1,0:T(1,128)}', space=vmem, size = 0x9000, scoped, tag = 'internal scratch']
  %s0 = inlined_call_operand.hbm [shape: f32[16,128], index: 0, kind: input, shape index: {}]
  %s1 = inlined_call_operand.hbm [shape: f32[128,128], index: 1, kind: input, shape index: {}]
  %s2 = inlined_call_operand.vmem [shape: f32[1,128], index: 2, kind: input, shape index: {}]
  %s3 = inlined_call_operand.hbm [shape: f32[128,128], index: 3, kind: input, shape index: {}]
  %s4 = inlined_call_operand.vmem [shape: f32[1,128], index: 4, kind: input, shape index: {}]
  %s5 = inlined_call_operand.hbm [shape: f32[128,128], index: 5, kind: input, shape index: {}]
  %s6 = inlined_call_operand.vmem [shape: f32[1,128], index: 6, kind: input, shape index: {}]
  %s7 = inlined_call_operand.hbm [shape: f32[16,128], index: 7, kind: output, shape index: {}]
  %s8 = sld [smem:[#allocation0]]
  $region54: #{tpu_custom_call.1} parent=0
    _
  %s10 = ssub.s32 1, %s8
  %s11 = scalar_select 0, %s10, %s8
  $region1: #{tpu_custom_call.1} parent=0
    #allocation2 [shape = 'u8[65536]{0}', space=vmem, size = 0x10000, scoped, tag = 'input window, operand 0, single buffered']
    #allocation3 [shape = 's32[1]{0}', space=sflag, size = 0x4, scoped, tag = 'scoped memory for tpu_custom_call.1']
    #allocation4 [shape = 's32[1]{0}', space=sflag, size = 0x4, scoped, tag = 'scoped memory for tpu_custom_call.1']
    #allocation5 [shape = 'u8[65536]{0}', space=vmem, size = 0x10000, scoped, tag = 'input window, operand 1, single buffered']
    #allocation6 [shape = 's32[1]{0}', space=sflag, size = 0x4, scoped, tag = 'scoped memory for tpu_custom_call.1']
    #allocation7 [shape = 'u8[65536]{0}', space=vmem, size = 0x10000, scoped, tag = 'input window, operand 3, single buffered']
    #allocation8 [shape = 'u8[65536]{0}', space=vmem, size = 0x10000, scoped, tag = 'input window, operand 5, single buffered']
    #allocation9 [shape = 's32[1]{0}', space=sflag, size = 0x4, scoped, tag = 'scoped memory for tpu_custom_call.1']
    #allocation10 [shape = 'u8[65536]{0}', space=vmem, size = 0x10000, scoped, tag = 'output window, operand 0, single buffered']
    %12 = vsyncpa [#allocation3], 0
    %13 = vsyncpa [#allocation6], 0
    %14 = vsyncpa [#allocation9], 0
    %15 = vsyncpa [#allocation4], 0
    // Predicated region
    $region2: #{tpu_custom_call.1} parent=1 // pred_check
      _
    $region3: #{tpu_custom_call.1} parent=1 // pred_check_branch
      %17 = sbr.rel (0) target = $region5
    $region4: #{tpu_custom_call.1} parent=1 // pred_region
      %19 = vsyncadd [#allocation3], 1792
      %s20 = sshll.u32 %s0, 4
      %s21 = int_to_ptr.hbm [resolvable:$true] %s20
      %s22 = sshll.u32 [#allocation2], 4
      %s23 = int_to_ptr.vmem [resolvable:$true] %s22
      %28 = dma.hbm_to_vmem [thread:$0]  %s21, 256, %s23, [#allocation3], 128, 128, 8
    $region5: #{tpu_custom_call.1} parent=1 // pred_fallthru
      _
    // Predicated region
    $region6: #{tpu_custom_call.1} parent=1 // pred_check
      _
    $region7: #{tpu_custom_call.1} parent=1 // pred_check_branch
      %30 = sbr.rel (0) target = $region9
    $region8: #{tpu_custom_call.1} parent=1 // pred_region
      %32 = vsyncadd [#allocation6], 0
      %s33 = sshll.u32 %s1, 4
      %s34 = int_to_ptr.hbm [resolvable:$true] %s33
      %s35 = sshll.u32 [#allocation5], 4
      %s36 = int_to_ptr.vmem [resolvable:$true] %s35
      %41 = dma.hbm_to_vmem [thread:$0]  %s34, 2048, %s36, [#allocation6], 128, 128, 8
    $region9: #{tpu_custom_call.1} parent=1 // pred_fallthru
      _
    // Predicated region
    $region10: #{tpu_custom_call.1} parent=1 // pred_check
      _
    $region11: #{tpu_custom_call.1} parent=1 // pred_check_branch
      %43 = sbr.rel (0) target = $region13
    $region12: #{tpu_custom_call.1} parent=1 // pred_region
      _
    $region13: #{tpu_custom_call.1} parent=1 // pred_fallthru
      _
    // Predicated region
    $region14: #{tpu_custom_call.1} parent=1 // pred_check
      _
    $region15: #{tpu_custom_call.1} parent=1 // pred_check_branch
      %45 = sbr.rel (0) target = $region17
    $region16: #{tpu_custom_call.1} parent=1 // pred_region
      %47 = vsyncadd [#allocation6], 0
      %s48 = sshll.u32 %s3, 4
      %s49 = int_to_ptr.hbm [resolvable:$true] %s48
      %s50 = sshll.u32 [#allocation7], 4
      %s51 = int_to_ptr.vmem [resolvable:$true] %s50
      %56 = dma.hbm_to_vmem [thread:$0]  %s49, 2048, %s51, [#allocation6], 128, 128, 8
    $region17: #{tpu_custom_call.1} parent=1 // pred_fallthru
      _
    // Predicated region
    $region18: #{tpu_custom_call.1} parent=1 // pred_check
      _
    $region19: #{tpu_custom_call.1} parent=1 // pred_check_branch
      %58 = sbr.rel (0) target = $region21
    $region20: #{tpu_custom_call.1} parent=1 // pred_region
      _
    $region21: #{tpu_custom_call.1} parent=1 // pred_fallthru
      _
    // Predicated region
    $region22: #{tpu_custom_call.1} parent=1 // pred_check
      _
    $region23: #{tpu_custom_call.1} parent=1 // pred_check_branch
      %60 = sbr.rel (0) target = $region25
    $region24: #{tpu_custom_call.1} parent=1 // pred_region
      %62 = vsyncadd [#allocation9], 0
      %s63 = sshll.u32 %s5, 4
      %s64 = int_to_ptr.hbm [resolvable:$true] %s63
      %s65 = sshll.u32 [#allocation8], 4
      %s66 = int_to_ptr.vmem [resolvable:$true] %s65
      %71 = dma.hbm_to_vmem [thread:$0]  %s64, 2048, %s66, [#allocation9], 128, 128, 8
    $region25: #{tpu_custom_call.1} parent=1 // pred_fallthru
      _
    // Predicated region
    $region26: #{tpu_custom_call.1} parent=1 // pred_check
      _
    $region27: #{tpu_custom_call.1} parent=1 // pred_check_branch
      %73 = sbr.rel (0) target = $region29
    $region28: #{tpu_custom_call.1} parent=1 // pred_region
      _
    $region29: #{tpu_custom_call.1} parent=1 // pred_fallthru
      _
    // Predicated region
    $region30: #{tpu_custom_call.1} parent=1 // pred_check
      _
    $region31: #{tpu_custom_call.1} parent=1 // pred_check_branch
      %75 = sbr.rel (0) target = $region33
    $region32: #{tpu_custom_call.1} parent=1 // pred_region
      %77 = dma.done [#allocation3], 2048
    $region33: #{tpu_custom_call.1} parent=1 // pred_fallthru
      _
    // Predicated region
    $region34: #{tpu_custom_call.1} parent=1 // pred_check
      _
    $region35: #{tpu_custom_call.1} parent=1 // pred_check_branch
      %79 = sbr.rel (0) target = $region37
    $region36: #{tpu_custom_call.1} parent=1 // pred_region
      %81 = dma.done [#allocation6], 2048
    $region37: #{tpu_custom_call.1} parent=1 // pred_fallthru
      _
    // Predicated region
    $region38: #{tpu_custom_call.1} parent=1 // pred_check
      _
    $region39: #{tpu_custom_call.1} parent=1 // pred_check_branch
      %83 = sbr.rel (0) target = $region41
    $region40: #{tpu_custom_call.1} parent=1 // pred_region
      %85 = dma.done [#allocation6], 2048
    $region41: #{tpu_custom_call.1} parent=1 // pred_fallthru
      _
    // Predicated region
    $region42: #{tpu_custom_call.1} parent=1 // pred_check
      _
    $region43: #{tpu_custom_call.1} parent=1 // pred_check_branch
      %87 = sbr.rel (0) target = $region45
    $region44: #{tpu_custom_call.1} parent=1 // pred_region
      %89 = dma.done [#allocation9], 2048
    $region45: #{tpu_custom_call.1} parent=1 // pred_fallthru
      _
    %v90 = vld [vmem:[#allocation2] sm:$0xff]
    %v91 = vld [vmem:[#allocation2 + $0x8] sm:$0xff]
    %v92 = vld [vmem:[#allocation2 + $0x10] sm:$0xff]
    %v93 = vld [vmem:[#allocation2 + $0x18] sm:$0xff]
    %v94 = vld [vmem:[#allocation2 + $0x20] sm:$0xff]
    %v95 = vld [vmem:[#allocation2 + $0x28] sm:$0xff]
    %v96 = vld [vmem:[#allocation2 + $0x30] sm:$0xff]
    %v97 = vld [vmem:[#allocation2 + $0x38] sm:$0xff]
    %v98 = vld [vmem:[#allocation2 + $0x40] sm:$0xff]
    %v99 = vld [vmem:[#allocation2 + $0x48] sm:$0xff]
    %v100 = vld [vmem:[#allocation2 + $0x50] sm:$0xff]
    %v101 = vld [vmem:[#allocation2 + $0x58] sm:$0xff]
    %v102 = vld [vmem:[#allocation2 + $0x60] sm:$0xff]
    %v103 = vld [vmem:[#allocation2 + $0x68] sm:$0xff]
    %v104 = vld [vmem:[#allocation2 + $0x70] sm:$0xff]
    %v105 = vld [vmem:[#allocation2 + $0x78] sm:$0xff]
    %v106 = vld [vmem:[#allocation5] sm:$0xff]
    %v107 = vld [vmem:[#allocation5 + $0x8] sm:$0xff]
    %v108 = vld [vmem:[#allocation5 + $0x10] sm:$0xff]
    %v109 = vld [vmem:[#allocation5 + $0x18] sm:$0xff]
    %v110 = vld [vmem:[#allocation5 + $0x20] sm:$0xff]
    %v111 = vld [vmem:[#allocation5 + $0x28] sm:$0xff]
    %v112 = vld [vmem:[#allocation5 + $0x30] sm:$0xff]
    %v113 = vld [vmem:[#allocation5 + $0x38] sm:$0xff]
    %v114 = vld [vmem:[#allocation5 + $0x40] sm:$0xff]
    %v115 = vld [vmem:[#allocation5 + $0x48] sm:$0xff]
    %v116 = vld [vmem:[#allocation5 + $0x50] sm:$0xff]
    %v117 = vld [vmem:[#allocation5 + $0x58] sm:$0xff]
    %v118 = vld [vmem:[#allocation5 + $0x60] sm:$0xff]
    %v119 = vld [vmem:[#allocation5 + $0x68] sm:$0xff]
    %v120 = vld [vmem:[#allocation5 + $0x70] sm:$0xff]
    %v121 = vld [vmem:[#allocation5 + $0x78] sm:$0xff]
    %v122 = vld [vmem:[%s2] sm:$0x1]
    %v124 = vperm.slane %v122, 0
    %126 = vmatpush.msra.mxu0 %v121
    %127 = vmatpush.msra.mxu0 %v120
    %128 = vmatpush.msra.mxu0 %v119
    %129 = vmatpush.msra.mxu0 %v118
    %130 = vmatpush.msra.mxu0 %v117
    %131 = vmatpush.msra.mxu0 %v116
    %132 = vmatpush.msra.mxu0 %v115
    %133 = vmatpush.msra.mxu0 %v114
    %134 = vmatpush.msra.mxu0 %v113
    %135 = vmatpush.msra.mxu0 %v112
    %136 = vmatpush.msra.mxu0 %v111
    %137 = vmatpush.msra.mxu0 %v110
    %138 = vmatpush.msra.mxu0 %v109
    %139 = vmatpush.msra.mxu0 %v108
    %140 = vmatpush.msra.mxu0 %v107
    %141 = vmatpush.msra.mxu0 %v106
    %142 = vmatmul.f32.gmra.mxu0 %v90
    %v143 = vpop.f32.mrf.mxu0
    %v144 = vadd.f32 %v124, %v143
    %145 = vmatmul.f32.gmra.mxu0 %v91
    %v146 = vpop.f32.mrf.mxu0
    %v147 = vadd.f32 %v124, %v146
    %148 = vmatmul.f32.gmra.mxu0 %v92
    %v149 = vpop.f32.mrf.mxu0
    %v150 = vadd.f32 %v124, %v149
    %151 = vmatmul.f32.gmra.mxu0 %v93
    %v152 = vpop.f32.mrf.mxu0
    %v153 = vadd.f32 %v124, %v152
    %154 = vmatmul.f32.gmra.mxu0 %v94
    %v155 = vpop.f32.mrf.mxu0
    %v156 = vadd.f32 %v124, %v155
    %157 = vmatmul.f32.gmra.mxu0 %v95
    %v158 = vpop.f32.mrf.mxu0
    %v159 = vadd.f32 %v124, %v158
    %160 = vmatmul.f32.gmra.mxu0 %v96
    %v161 = vpop.f32.mrf.mxu0
    %v162 = vadd.f32 %v124, %v161
    %163 = vmatmul.f32.gmra.mxu0 %v97
    %v164 = vpop.f32.mrf.mxu0
    %v165 = vadd.f32 %v124, %v164
    %166 = vmatmul.f32.gmra.mxu0 %v98
    %v167 = vpop.f32.mrf.mxu0
    %v168 = vadd.f32 %v124, %v167
    %169 = vmatmul.f32.gmra.mxu0 %v99
    %v170 = vpop.f32.mrf.mxu0
    %v171 = vadd.f32 %v124, %v170
    %172 = vmatmul.f32.gmra.mxu0 %v100
    %v173 = vpop.f32.mrf.mxu0
    %v174 = vadd.f32 %v124, %v173
    %175 = vmatmul.f32.gmra.mxu0 %v101
    %v176 = vpop.f32.mrf.mxu0
    %v177 = vadd.f32 %v124, %v176
    %178 = vmatmul.f32.gmra.mxu0 %v102
    %v179 = vpop.f32.mrf.mxu0
    %v180 = vadd.f32 %v124, %v179
    %181 = vmatmul.f32.gmra.mxu0 %v103
    %v182 = vpop.f32.mrf.mxu0
    %v183 = vadd.f32 %v124, %v182
    %184 = vmatmul.f32.gmra.mxu0 %v104
    %v185 = vpop.f32.mrf.mxu0
    %v186 = vadd.f32 %v124, %v185
    %187 = vmatmul.f32.gmra.mxu0 %v105
    %v188 = vpop.f32.mrf.mxu0
    %v189 = vadd.f32 %v124, %v188
    %190 = vdwg.mxu0
    %v191 = vmax.f32 %v144, 0.0
    %v192 = vmax.f32 %v147, 0.0
    %v193 = vmax.f32 %v150, 0.0
    %v194 = vmax.f32 %v153, 0.0
    %v195 = vmax.f32 %v156, 0.0
    %v196 = vmax.f32 %v159, 0.0
    %v197 = vmax.f32 %v162, 0.0
    %v198 = vmax.f32 %v165, 0.0
    %v199 = vmax.f32 %v168, 0.0
    %v200 = vmax.f32 %v171, 0.0
    %v201 = vmax.f32 %v174, 0.0
    %v202 = vmax.f32 %v177, 0.0
    %v203 = vmax.f32 %v180, 0.0
    %v204 = vmax.f32 %v183, 0.0
    %v205 = vmax.f32 %v186, 0.0
    %v206 = vmax.f32 %v189, 0.0
    %v207 = vld [vmem:[#allocation7] sm:$0xff]
    %v208 = vld [vmem:[#allocation7 + $0x8] sm:$0xff]
    %v209 = vld [vmem:[#allocation7 + $0x10] sm:$0xff]
    %v210 = vld [vmem:[#allocation7 + $0x18] sm:$0xff]
    %v211 = vld [vmem:[#allocation7 + $0x20] sm:$0xff]
    %v212 = vld [vmem:[#allocation7 + $0x28] sm:$0xff]
    %v213 = vld [vmem:[#allocation7 + $0x30] sm:$0xff]
    %v214 = vld [vmem:[#allocation7 + $0x38] sm:$0xff]
    %v215 = vld [vmem:[#allocation7 + $0x40] sm:$0xff]
    %v216 = vld [vmem:[#allocation7 + $0x48] sm:$0xff]
    %v217 = vld [vmem:[#allocation7 + $0x50] sm:$0xff]
    %v218 = vld [vmem:[#allocation7 + $0x58] sm:$0xff]
    %v219 = vld [vmem:[#allocation7 + $0x60] sm:$0xff]
    %v220 = vld [vmem:[#allocation7 + $0x68] sm:$0xff]
    %v221 = vld [vmem:[#allocation7 + $0x70] sm:$0xff]
    %v222 = vld [vmem:[#allocation7 + $0x78] sm:$0xff]
    %v223 = vld [vmem:[%s4] sm:$0x1]
    %v225 = vperm.slane %v223, 0
    %227 = vmatpush.msra.mxu0 %v222
    %228 = vmatpush.msra.mxu0 %v221
    %229 = vmatpush.msra.mxu0 %v220
    %230 = vmatpush.msra.mxu0 %v219
    %231 = vmatpush.msra.mxu0 %v218
    %232 = vmatpush.msra.mxu0 %v217
    %233 = vmatpush.msra.mxu0 %v216
    %234 = vmatpush.msra.mxu0 %v215
    %235 = vmatpush.msra.mxu0 %v214
    %236 = vmatpush.msra.mxu0 %v213
    %237 = vmatpush.msra.mxu0 %v212
    %238 = vmatpush.msra.mxu0 %v211
    %239 = vmatpush.msra.mxu0 %v210
    %240 = vmatpush.msra.mxu0 %v209
    %241 = vmatpush.msra.mxu0 %v208
    %242 = vmatpush.msra.mxu0 %v207
    %243 = vmatmul.f32.gmra.mxu0 %v191
    %v244 = vpop.f32.mrf.mxu0
    %v245 = vadd.f32 %v225, %v244
    %246 = vmatmul.f32.gmra.mxu0 %v192
    %v247 = vpop.f32.mrf.mxu0
    %v248 = vadd.f32 %v225, %v247
    %249 = vmatmul.f32.gmra.mxu0 %v193
    %v250 = vpop.f32.mrf.mxu0
    %v251 = vadd.f32 %v225, %v250
    %252 = vmatmul.f32.gmra.mxu0 %v194
    %v253 = vpop.f32.mrf.mxu0
    %v254 = vadd.f32 %v225, %v253
    %255 = vmatmul.f32.gmra.mxu0 %v195
    %v256 = vpop.f32.mrf.mxu0
    %v257 = vadd.f32 %v225, %v256
    %258 = vmatmul.f32.gmra.mxu0 %v196
    %v259 = vpop.f32.mrf.mxu0
    %v260 = vadd.f32 %v225, %v259
    %261 = vmatmul.f32.gmra.mxu0 %v197
    %v262 = vpop.f32.mrf.mxu0
    %v263 = vadd.f32 %v225, %v262
    %264 = vmatmul.f32.gmra.mxu0 %v198
    %v265 = vpop.f32.mrf.mxu0
    %v266 = vadd.f32 %v225, %v265
    %267 = vmatmul.f32.gmra.mxu0 %v199
    %v268 = vpop.f32.mrf.mxu0
    %v269 = vadd.f32 %v225, %v268
    %270 = vmatmul.f32.gmra.mxu0 %v200
    %v271 = vpop.f32.mrf.mxu0
    %v272 = vadd.f32 %v225, %v271
    %273 = vmatmul.f32.gmra.mxu0 %v201
    %v274 = vpop.f32.mrf.mxu0
    %v275 = vadd.f32 %v225, %v274
    %276 = vmatmul.f32.gmra.mxu0 %v202
    %v277 = vpop.f32.mrf.mxu0
    %v278 = vadd.f32 %v225, %v277
    %279 = vmatmul.f32.gmra.mxu0 %v203
    %v280 = vpop.f32.mrf.mxu0
    %v281 = vadd.f32 %v225, %v280
    %282 = vmatmul.f32.gmra.mxu0 %v204
    %v283 = vpop.f32.mrf.mxu0
    %v284 = vadd.f32 %v225, %v283
    %285 = vmatmul.f32.gmra.mxu0 %v205
    %v286 = vpop.f32.mrf.mxu0
    %v287 = vadd.f32 %v225, %v286
    %288 = vmatmul.f32.gmra.mxu0 %v206
    %v289 = vpop.f32.mrf.mxu0
    %v290 = vadd.f32 %v225, %v289
    %291 = vdwg.mxu0
    %v292 = vmax.f32 %v245, 0.0
    %v293 = vmax.f32 %v248, 0.0
    %v294 = vmax.f32 %v251, 0.0
    %v295 = vmax.f32 %v254, 0.0
    %v296 = vmax.f32 %v257, 0.0
    %v297 = vmax.f32 %v260, 0.0
    %v298 = vmax.f32 %v263, 0.0
    %v299 = vmax.f32 %v266, 0.0
    %v300 = vmax.f32 %v269, 0.0
    %v301 = vmax.f32 %v272, 0.0
    %v302 = vmax.f32 %v275, 0.0
    %v303 = vmax.f32 %v278, 0.0
    %v304 = vmax.f32 %v281, 0.0
    %v305 = vmax.f32 %v284, 0.0
    %v306 = vmax.f32 %v287, 0.0
    %v307 = vmax.f32 %v290, 0.0
    %v308 = vld [vmem:[#allocation8] sm:$0xff]
    %v309 = vld [vmem:[#allocation8 + $0x8] sm:$0xff]
    %v310 = vld [vmem:[#allocation8 + $0x10] sm:$0xff]
    %v311 = vld [vmem:[#allocation8 + $0x18] sm:$0xff]
    %v312 = vld [vmem:[#allocation8 + $0x20] sm:$0xff]
    %v313 = vld [vmem:[#allocation8 + $0x28] sm:$0xff]
    %v314 = vld [vmem:[#allocation8 + $0x30] sm:$0xff]
    %v315 = vld [vmem:[#allocation8 + $0x38] sm:$0xff]
    %v316 = vld [vmem:[#allocation8 + $0x40] sm:$0xff]
    %v317 = vld [vmem:[#allocation8 + $0x48] sm:$0xff]
    %v318 = vld [vmem:[#allocation8 + $0x50] sm:$0xff]
    %v319 = vld [vmem:[#allocation8 + $0x58] sm:$0xff]
    %v320 = vld [vmem:[#allocation8 + $0x60] sm:$0xff]
    %v321 = vld [vmem:[#allocation8 + $0x68] sm:$0xff]
    %v322 = vld [vmem:[#allocation8 + $0x70] sm:$0xff]
    %v323 = vld [vmem:[#allocation8 + $0x78] sm:$0xff]
    %v324 = vld [vmem:[%s6] sm:$0x1]
    %v326 = vperm.slane %v324, 0
    %328 = vmatpush.msra.mxu0 %v323
    %329 = vmatpush.msra.mxu0 %v322
    %330 = vmatpush.msra.mxu0 %v321
    %331 = vmatpush.msra.mxu0 %v320
    %332 = vmatpush.msra.mxu0 %v319
    %333 = vmatpush.msra.mxu0 %v318
    %334 = vmatpush.msra.mxu0 %v317
    %335 = vmatpush.msra.mxu0 %v316
    %336 = vmatpush.msra.mxu0 %v315
    %337 = vmatpush.msra.mxu0 %v314
    %338 = vmatpush.msra.mxu0 %v313
    %339 = vmatpush.msra.mxu0 %v312
    %340 = vmatpush.msra.mxu0 %v311
    %341 = vmatpush.msra.mxu0 %v310
    %342 = vmatpush.msra.mxu0 %v309
    %343 = vmatpush.msra.mxu0 %v308
    %344 = vmatmul.f32.gmra.mxu0 %v292
    %v345 = vpop.f32.mrf.mxu0
    %v346 = vadd.f32 %v326, %v345
    %347 = vmatmul.f32.gmra.mxu0 %v293
    %v348 = vpop.f32.mrf.mxu0
    %v349 = vadd.f32 %v326, %v348
    %350 = vmatmul.f32.gmra.mxu0 %v294
    %v351 = vpop.f32.mrf.mxu0
    %v352 = vadd.f32 %v326, %v351
    %353 = vmatmul.f32.gmra.mxu0 %v295
    %v354 = vpop.f32.mrf.mxu0
    %v355 = vadd.f32 %v326, %v354
    %356 = vmatmul.f32.gmra.mxu0 %v296
    %v357 = vpop.f32.mrf.mxu0
    %v358 = vadd.f32 %v326, %v357
    %359 = vmatmul.f32.gmra.mxu0 %v297
    %v360 = vpop.f32.mrf.mxu0
    %v361 = vadd.f32 %v326, %v360
    %362 = vmatmul.f32.gmra.mxu0 %v298
    %v363 = vpop.f32.mrf.mxu0
    %v364 = vadd.f32 %v326, %v363
    %365 = vmatmul.f32.gmra.mxu0 %v299
    %v366 = vpop.f32.mrf.mxu0
    %v367 = vadd.f32 %v326, %v366
    %368 = vmatmul.f32.gmra.mxu0 %v300
    %v369 = vpop.f32.mrf.mxu0
    %v370 = vadd.f32 %v326, %v369
    %371 = vmatmul.f32.gmra.mxu0 %v301
    %v372 = vpop.f32.mrf.mxu0
    %v373 = vadd.f32 %v326, %v372
    %374 = vmatmul.f32.gmra.mxu0 %v302
    %v375 = vpop.f32.mrf.mxu0
    %v376 = vadd.f32 %v326, %v375
    %377 = vmatmul.f32.gmra.mxu0 %v303
    %v378 = vpop.f32.mrf.mxu0
    %v379 = vadd.f32 %v326, %v378
    %380 = vmatmul.f32.gmra.mxu0 %v304
    %v381 = vpop.f32.mrf.mxu0
    %v382 = vadd.f32 %v326, %v381
    %383 = vmatmul.f32.gmra.mxu0 %v305
    %v384 = vpop.f32.mrf.mxu0
    %v385 = vadd.f32 %v326, %v384
    %386 = vmatmul.f32.gmra.mxu0 %v306
    %v387 = vpop.f32.mrf.mxu0
    %v388 = vadd.f32 %v326, %v387
    %389 = vmatmul.f32.gmra.mxu0 %v307
    %v390 = vpop.f32.mrf.mxu0
    %v391 = vadd.f32 %v326, %v390
    %392 = vdwg.mxu0
    %393 = vst [vmem:[#allocation10] sm:$0xff] %v346
    %394 = vst [vmem:[#allocation10 + $0x8] sm:$0xff] %v349
    %395 = vst [vmem:[#allocation10 + $0x10] sm:$0xff] %v352
    %396 = vst [vmem:[#allocation10 + $0x18] sm:$0xff] %v355
    %397 = vst [vmem:[#allocation10 + $0x20] sm:$0xff] %v358
    %398 = vst [vmem:[#allocation10 + $0x28] sm:$0xff] %v361
    %399 = vst [vmem:[#allocation10 + $0x30] sm:$0xff] %v364
    %400 = vst [vmem:[#allocation10 + $0x38] sm:$0xff] %v367
    %401 = vst [vmem:[#allocation10 + $0x40] sm:$0xff] %v370
    %402 = vst [vmem:[#allocation10 + $0x48] sm:$0xff] %v373
    %403 = vst [vmem:[#allocation10 + $0x50] sm:$0xff] %v376
    %404 = vst [vmem:[#allocation10 + $0x58] sm:$0xff] %v379
    %405 = vst [vmem:[#allocation10 + $0x60] sm:$0xff] %v382
    %406 = vst [vmem:[#allocation10 + $0x68] sm:$0xff] %v385
    %407 = vst [vmem:[#allocation10 + $0x70] sm:$0xff] %v388
    %408 = vst [vmem:[#allocation10 + $0x78] sm:$0xff] %v391
    // Predicated region
    $region46: #{tpu_custom_call.1} parent=1 // pred_check
      _
    $region47: #{tpu_custom_call.1} parent=1 // pred_check_branch
      %410 = sbr.rel (0) target = $region49
    $region48: #{tpu_custom_call.1} parent=1 // pred_region
      %412 = vsyncadd [#allocation4], 1792
      %s413 = sshll.u32 [#allocation10], 4
      %s414 = int_to_ptr.vmem [resolvable:$true] %s413
      %s415 = sshll.u32 %s7, 4
      %s416 = int_to_ptr.hbm [resolvable:$true] %s415
      %421 = dma.vmem_to_hbm [thread:$0]  %s414, 256, %s416, [#allocation4], 128, 128, 8
    $region49: #{tpu_custom_call.1} parent=1 // pred_fallthru
      _
    // Predicated region
    $region50: #{tpu_custom_call.1} parent=1 // pred_check
      _
    $region51: #{tpu_custom_call.1} parent=1 // pred_check_branch
      %423 = sbr.rel (0) target = $region53
    $region52: #{tpu_custom_call.1} parent=1 // pred_region
      %425 = dma.done [#allocation4], 2048
    $region53: #{tpu_custom_call.1} parent=1 // pred_fallthru
      _
    %426 = vsyncpa [#allocation3], 1
    %427 = vsyncpa [#allocation6], 1
    %428 = vsyncpa [#allocation9], 1
    %429 = vsyncpa [#allocation4], 1

</llo_original>
